<compile_context>
chip_gen: v7x
topology: tpu7x:2x2x1
jax: 0.10.0
libtpu: 0.0.40
codegen_flags: <defaults>
</compile_context>

<pallas_src>
import functools
import jax
import jax.numpy as jnp
from jax import lax
from jax.experimental import pallas as pl
from jax.experimental.pallas import tpu as pltpu

LANE = 128


def _round_up(x, m):
    return (x + m - 1) // m * m


# ----------------------------------------------------------------------------
# Fused SimMIM kernel (per token tile):
#   patch-embed matmul -> GELU + encoder matmul (single, unmasked pass)
#   -> z_m via mask-token blend in z-space -> decoder 1x1 matmul
#   -> token-space masked-L1 numerator partial sum.
# ----------------------------------------------------------------------------
def _fused_simmim_kernel(patch_ref, mask_ref, we_ref, be_ref,
                         wenc_ref, benc_ref, ztok_ref, wdec_ref, bdec_ref,
                         zmask_ref, z_ref, num_ref):
    patches = patch_ref[...]                                # [T, Kp] f32
    m = mask_ref[...]                                       # [T, 1]  f32 (0/1)

    # Shared patch-embed matmul (bf16 MXU operands, f32 accumulation).
    feat = jnp.dot(patches.astype(jnp.bfloat16), we_ref[...],
                   preferred_element_type=jnp.float32) + be_ref[...]

    # Single encoder pass (the only full-tile GELU + matmul).
    g = jax.nn.gelu(feat).astype(jnp.bfloat16)
    z_u = jnp.dot(g, wenc_ref[...],
                  preferred_element_type=jnp.float32) + benc_ref[...]

    # Masked branch: binary mask + linear encoder head => z_m is a row blend with
    # the precomputed mask-token encoding (exact for a 0/1 mask).
    z_m = jnp.where(m > 0.0, ztok_ref[...], z_u)

    zmask_ref[...] = z_m.astype(jnp.bfloat16)
    z_ref[...] = z_u.astype(jnp.bfloat16)

    # Decoder: 1x1 conv == per-token linear (PixelShuffle handled by layout).
    dec = jnp.dot(z_m.astype(jnp.bfloat16), wdec_ref[...],
                  preferred_element_type=jnp.float32) + bdec_ref[...]

    # Token-space masked L1 numerator partial sum: each decoder token reconstructs
    # exactly the pixels of its own patch; padded lanes are zero in both operands.
    diff = jnp.sum(jnp.abs(patches - dec), axis=-1, keepdims=True)   # [T, 1]
    num = jnp.sum(diff * m)
    num_ref[...] = jnp.full(num_ref.shape, num, dtype=jnp.float32)


# ----------------------------------------------------------------------------
# InfoNCE kernel: K-tiled Gram accumulation of the pre-normalized q = [q_a; q_b]
# (bf16 operands, f32 accumulator), masked logsumexp in f32, positives on the
# "swapped diagonal".  Mathematically identical to the reference
# (loss_a + loss_b) / 2 with cat([ab, aa]) / cat([ba, bb]) cross-entropies.
# ----------------------------------------------------------------------------
def _info_nce_kernel(q_ref, loss_ref, g_acc, *, inv_temp):
    k = pl.program_id(0)

    @pl.when(k == 0)
    def _():
        g_acc[...] = jnp.zeros_like(g_acc)

    qk = q_ref[...]                                         # [2B, k_tile] bf16
    g_acc[...] += lax.dot_general(qk, qk, (((1,), (1,)), ((), ())),
                                  preferred_element_type=jnp.float32)

    @pl.when(k == pl.num_programs(0) - 1)
    def _():
        g = g_acc[...] * inv_temp                           # [2B, 2B] f32
        n = g.shape[0]
        half = n // 2
        row = lax.broadcasted_iota(jnp.int32, (n, n), 0)
        col = lax.broadcasted_iota(jnp.int32, (n, n), 1)
        g = g - jnp.where(row == col, 1e9, 0.0)             # mask aa/bb diagonals

        mx = jnp.max(g, axis=-1, keepdims=True)
        lse = mx + jnp.log(jnp.sum(jnp.exp(g - mx), axis=-1, keepdims=True))

        # Positive logit for row r is at column (r + half) mod n (never the diag).
        pos_col = jnp.where(row < half, row + half, row - half)
        pos = jnp.sum(jnp.where(col == pos_col, g, 0.0), axis=-1, keepdims=True)

        loss = jnp.mean(lse - pos)                          # == (loss_a + loss_b)/2
        loss_ref[...] = jnp.full(loss_ref.shape, loss, dtype=jnp.float32)


# ----------------------------------------------------------------------------
# Parameters (synthetic encoder + SimMIM decoder), pre-padded to 128 lanes.
# ----------------------------------------------------------------------------
class SimMIMParams:
    def __init__(self, key, in_chans, patch_size, num_features, encoder_stride):
        assert encoder_stride == patch_size, \
            "token-space masked L1 requires encoder_stride == patch_size"
        # Strong guard: decoder pixel count per token must equal patch pixel count,
        # otherwise |patches - dec| would silently mix unrelated padded lanes.
        assert in_chans * patch_size ** 2 == encoder_stride ** 2 * 3, \
            "in_chans * patch_size**2 must equal encoder_stride**2 * 3"
        self.in_chans = in_chans
        self.patch_size = patch_size
        self.num_features = num_features
        self.encoder_stride = encoder_stride

        pdim = in_chans * patch_size * patch_size
        out_c = encoder_stride * encoder_stride * 3
        self.k_pad = _round_up(pdim, LANE)
        self.f_pad = _round_up(num_features, LANE)
        self.o_pad = _round_up(out_c, LANE)

        k = jax.random.split(key, 6)
        w_embed = 0.02 * jax.random.normal(k[0], (pdim, num_features), jnp.float32)
        b_embed = jnp.zeros((num_features,), jnp.float32)
        mask_token = 0.02 * jax.random.normal(k[1], (1, num_features), jnp.float32)
        w_enc = 0.02 * jax.random.normal(k[2], (num_features, num_features), jnp.float32)
        b_enc = jnp.zeros((num_features,), jnp.float32)
        w_dec = 0.02 * jax.random.normal(k[3], (num_features, out_c), jnp.float32)
        b_dec = 0.02 * jax.random.normal(k[4], (out_c,), jnp.float32)

        def pad2(a, rows, cols):
            return jnp.pad(a, ((0, rows - a.shape[0]), (0, cols - a.shape[1])))

        # Weights in bf16 for the MXU; biases / mask token stay f32.
        self.w_embed = pad2(w_embed, self.k_pad, self.f_pad).astype(jnp.bfloat16)
        self.b_embed = pad2(b_embed.reshape(1, -1), 1, self.f_pad)
        self.mask_token = pad2(mask_token, 1, self.f_pad)
        self.w_enc = pad2(w_enc, self.f_pad, self.f_pad).astype(jnp.bfloat16)
        self.b_enc = pad2(b_enc.reshape(1, -1), 1, self.f_pad)
        self.w_dec = pad2(w_dec, self.f_pad, self.o_pad).astype(jnp.bfloat16)
        self.b_dec = pad2(b_dec.reshape(1, -1), 1, self.o_pad)
        # NOTE: num_features is padded 32->128, so contractions run at K=N=128;
        # pick num_features as a multiple of 128 when scaling up (v6e/v7x MXU).


def extract_patches(x, patch_size):
    # x: [B, C, H, W] -> [B*nH*nW, C*p*p]   (same (c, i, j) ordering as PixelShuffle)
    # TODO(synk): this NCHW->token relayout is the one remaining plain-JAX glue op;
    #             at large resolutions it could be expressed via BlockSpec index maps.
    b, c, h, w = x.shape
    nh, nw = h // patch_size, w // patch_size
    xp = x.reshape(b, c, nh, patch_size, nw, patch_size)
    xp = jnp.transpose(xp, (0, 2, 4, 1, 3, 5))              # [B, nH, nW, C, p, p]
    return xp.reshape(b * nh * nw, c * patch_size * patch_size), (b, nh, nw)


# ----------------------------------------------------------------------------
# SimMIM forward
# ----------------------------------------------------------------------------
def simmim_forward(params, x, mask, contrastive_coef):
    p = params.patch_size
    patches, (b, nh, nw) = extract_patches(x.astype(jnp.float32), p)
    n_tok = b * nh * nw

    # 512-token tiles when there is enough work; 16-aligned single tile otherwise
    # (16 keeps bf16 sublane packing happy for the z writebacks).
    tile = 512 if n_tok >= 512 else _round_up(n_tok, 16)
    n_tok_pad = _round_up(n_tok, tile)
    n_tiles = n_tok_pad // tile

    k_pad, f_pad, o_pad = params.k_pad, params.f_pad, params.o_pad
    assert k_pad == o_pad  # |patches - dec| must line up lane-for-lane

    patches_p = jnp.pad(
        patches, ((0, n_tok_pad - n_tok), (0, k_pad - patches.shape[1])))
    mask_tok = jnp.pad(mask.reshape(n_tok, 1).astype(jnp.float32),
                       ((0, n_tok_pad - n_tok), (0, 0)))

    # Precompute the encoder output of the mask token (1 x f_pad) with the same
    # bf16 matmul path as the kernel, so the in-kernel z-space blend is exact for
    # a 0/1 mask.
    z_tok_row = (jnp.dot(jax.nn.gelu(params.mask_token).astype(jnp.bfloat16),
                         params.w_enc, preferred_element_type=jnp.float32)
                 + params.b_enc)                            # [1, f_pad] f32

    z_mask_tok, z_tok_feat, num_part = pl.pallas_call(
        _fused_simmim_kernel,
        out_shape=(
            jax.ShapeDtypeStruct((n_tok_pad, f_pad), jnp.bfloat16),
            jax.ShapeDtypeStruct((n_tok_pad, f_pad), jnp.bfloat16),
            jax.ShapeDtypeStruct((n_tiles, 1, LANE), jnp.float32),
        ),
        grid=(n_tiles,),
        in_specs=[
            pl.BlockSpec((tile, k_pad), lambda t: (t, 0)),   # patches
            pl.BlockSpec((tile, 1), lambda t: (t, 0)),       # per-token mask
            pl.BlockSpec((k_pad, f_pad), lambda t: (0, 0)),  # w_embed
            pl.BlockSpec((1, f_pad), lambda t: (0, 0)),      # b_embed
            pl.BlockSpec((f_pad, f_pad), lambda t: (0, 0)),  # w_enc
            pl.BlockSpec((1, f_pad), lambda t: (0, 0)),      # b_enc
            pl.BlockSpec((1, f_pad), lambda t: (0, 0)),      # z_tok (mask-token enc)
            pl.BlockSpec((f_pad, o_pad), lambda t: (0, 0)),  # w_dec
            pl.BlockSpec((1, o_pad), lambda t: (0, 0)),      # b_dec
        ],
        out_specs=[
            pl.BlockSpec((tile, f_pad), lambda t: (t, 0)),       # z_mask tokens (bf16)
            pl.BlockSpec((tile, f_pad), lambda t: (t, 0)),       # z tokens (bf16)
            pl.BlockSpec((1, 1, LANE), lambda t: (t, 0, 0)),     # L1 numerator partials
        ],
        compiler_params=pltpu.CompilerParams(
            dimension_semantics=("parallel",)),
    )(patches_p, mask_tok, params.w_embed, params.b_embed,
      params.w_enc, params.b_enc, z_tok_row, params.w_dec, params.b_dec)

    num = jnp.sum(num_part[:, 0, 0])
    # den is a pure function of the host-resident mask: masked pixels per channel.
    den = jnp.sum(mask.astype(jnp.float32)) * float(p * p)
    loss_recon = num / (den + 1e-5) / params.in_chans

    # InfoNCE on flattened features: strip padded lanes + padded tokens first.
    nf = params.num_features
    zm = z_mask_tok[:n_tok, :nf].reshape(b, -1)     # q_a
    zu = z_tok_feat[:n_tok, :nf].reshape(b, -1)     # q_b
    q = jnp.concatenate([zm, zu], axis=0).astype(jnp.float32)   # [2B, D_q]

    # L2 normalize in f32 (F.normalize, eps=1e-12), bf16 operands for the Gram.
    inv_n = lax.rsqrt(jnp.maximum(jnp.sum(q * q, axis=-1, keepdims=True), 1e-24))
    qn = (q * inv_n).astype(jnp.bfloat16)

    d_q = qn.shape[1]
    k_tile = 2048 if d_q >= 2048 else _round_up(d_q, LANE)
    d_pad = _round_up(d_q, k_tile)
    qn = jnp.pad(qn, ((0, 0), (0, d_pad - d_q)))
    n_k = d_pad // k_tile
    two_b = qn.shape[0]

    loss_out = pl.pallas_call(
        functools.partial(_info_nce_kernel, inv_temp=1.0 / 0.07),
        out_shape=jax.ShapeDtypeStruct((1, LANE), jnp.float32),
        grid=(n_k,),
        in_specs=[pl.BlockSpec((two_b, k_tile), lambda k: (0, k))],
        out_specs=pl.BlockSpec((1, LANE), lambda k: (0, 0)),
        scratch_shapes=[pltpu.VMEM((two_b, two_b), jnp.float32)],
        compiler_params=pltpu.CompilerParams(
            dimension_semantics=("arbitrary",)),
    )(qn)
    nce = loss_out[0, 0]

    if contrastive_coef == -1:
        total = 0.0 * loss_recon + nce
    else:
        total = loss_recon + contrastive_coef * nce
    return total, loss_recon, nce


# ----------------------------------------------------------------------------
# main
# ----------------------------------------------------------------------------
if __name__ == "__main__":
    key = jax.random.PRNGKey(0)
    k_x, k_m, k_p = jax.random.split(key, 3)

    B, C_in, H, W = 2, 3, 16, 16
    patch_size = 4
    encoder_stride = 4
    num_features = 32
    lambda_ = 0.5

    x = jax.random.normal(k_x, (B, C_in, H, W), jnp.float32)
    mask = (jax.random.uniform(k_m, (B, H // patch_size, W // patch_size)) > 0.5
            ).astype(jnp.float32)

    params = SimMIMParams(k_p, C_in, patch_size, num_features, encoder_stride)

    fwd = jax.jit(lambda xx, mm: simmim_forward(params, xx, mm, lambda_))
    total, loss_recon, nce = fwd(x, mask)
    jax.block_until_ready((total, loss_recon, nce))
    print("KERNEL_OK")
</pallas_src>

<mosaic_0001>
module attributes {stable_mosaic.version = 11 : i64} {
  func.func @_fused_simmim_kernel(%arg0: i32, %arg1: memref<32x128xf32, #tpu.memory_space<vmem>>, %arg2: memref<32x1xf32, #tpu.memory_space<vmem>>, %arg3: memref<128x128xbf16, #tpu.memory_space<vmem>>, %arg4: memref<1x128xf32, #tpu.memory_space<vmem>>, %arg5: memref<128x128xbf16, #tpu.memory_space<vmem>>, %arg6: memref<1x128xf32, #tpu.memory_space<vmem>>, %arg7: memref<1x128xf32, #tpu.memory_space<vmem>>, %arg8: memref<128x128xbf16, #tpu.memory_space<vmem>>, %arg9: memref<1x128xf32, #tpu.memory_space<vmem>>, %arg10: memref<32x128xbf16, #tpu.memory_space<vmem>>, %arg11: memref<32x128xbf16, #tpu.memory_space<vmem>>, %arg12: memref<1x1x128xf32, #tpu.memory_space<vmem>>) attributes {dimension_semantics = [#tpu.dimension_semantics<parallel>], iteration_bounds = array<i64: 1>, scalar_prefetch = 0 : i64, scratch_operands = 0 : i64, tpu.core_type = #tpu.core_type<tc>, window_params = [{transform_indices = @transform_0, window_bounds = array<i64: 32, 128>}, {transform_indices = @transform_1, window_bounds = array<i64: 32, 1>}, {pipeline_mode = #tpu.pipeline_mode<synchronous>, transform_indices = @transform_2, window_bounds = array<i64: 128, 128>}, {pipeline_mode = #tpu.pipeline_mode<synchronous>, transform_indices = @transform_3, window_bounds = array<i64: 1, 128>}, {pipeline_mode = #tpu.pipeline_mode<synchronous>, transform_indices = @transform_4, window_bounds = array<i64: 128, 128>}, {pipeline_mode = #tpu.pipeline_mode<synchronous>, transform_indices = @transform_5, window_bounds = array<i64: 1, 128>}, {pipeline_mode = #tpu.pipeline_mode<synchronous>, transform_indices = @transform_6, window_bounds = array<i64: 1, 128>}, {pipeline_mode = #tpu.pipeline_mode<synchronous>, transform_indices = @transform_7, window_bounds = array<i64: 128, 128>}, {pipeline_mode = #tpu.pipeline_mode<synchronous>, transform_indices = @transform_8, window_bounds = array<i64: 1, 128>}, {transform_indices = @transform_9, window_bounds = array<i64: 32, 128>}, {transform_indices = @transform_10, window_bounds = array<i64: 32, 128>}, {transform_indices = @transform_11, window_bounds = array<i64: 1, 1, 128>}]} {
    %c0 = arith.constant 0 : index
    %c0_0 = arith.constant 0 : index
    %0 = vector.load %arg1[%c0, %c0_0] : memref<32x128xf32, #tpu.memory_space<vmem>>, vector<32x128xf32>
    %c0_1 = arith.constant 0 : index
    %c0_2 = arith.constant 0 : index
    %1 = vector.load %arg2[%c0_1, %c0_2] : memref<32x1xf32, #tpu.memory_space<vmem>>, vector<32x1xf32>
    %2 = arith.truncf %0 : vector<32x128xf32> to vector<32x128xbf16>
    %c0_3 = arith.constant 0 : index
    %c0_4 = arith.constant 0 : index
    %3 = vector.load %arg3[%c0_3, %c0_4] : memref<128x128xbf16, #tpu.memory_space<vmem>>, vector<128x128xbf16>
    %cst = arith.constant dense<0.000000e+00> : vector<32x128xf32>
    %4 = tpu.matmul %2, %3, %cst {dimension_numbers = #tpu.dot_dimension_numbers<[1], [0], [0], [1], [0, 0, 1, 1], [], []>} : vector<32x128xbf16>, vector<128x128xbf16>, vector<32x128xf32> -> vector<32x128xf32>
    %c0_5 = arith.constant 0 : index
    %c0_6 = arith.constant 0 : index
    %5 = vector.load %arg4[%c0_5, %c0_6] : memref<1x128xf32, #tpu.memory_space<vmem>>, vector<1x128xf32>
    %6 = vector.broadcast %5 : vector<1x128xf32> to vector<32x128xf32>
    %7 = arith.addf %4, %6 : vector<32x128xf32>
    %8 = arith.mulf %7, %7 : vector<32x128xf32>
    %9 = arith.mulf %7, %8 : vector<32x128xf32>
    %cst_7 = arith.constant 4.471500e-02 : f32
    %10 = vector.broadcast %cst_7 : f32 to vector<32x128xf32>
    %11 = arith.mulf %10, %9 : vector<32x128xf32>
    %12 = arith.addf %7, %11 : vector<32x128xf32>
    %cst_8 = arith.constant 0.797884583 : f32
    %13 = vector.broadcast %cst_8 : f32 to vector<32x128xf32>
    %14 = arith.mulf %13, %12 : vector<32x128xf32>
    %15 = math.tanh %14 : vector<32x128xf32>
    %cst_9 = arith.constant 1.000000e+00 : f32
    %16 = vector.broadcast %cst_9 : f32 to vector<32x128xf32>
    %17 = arith.addf %16, %15 : vector<32x128xf32>
    %cst_10 = arith.constant 5.000000e-01 : f32
    %18 = vector.broadcast %cst_10 : f32 to vector<32x128xf32>
    %19 = arith.mulf %18, %17 : vector<32x128xf32>
    %20 = arith.mulf %7, %19 : vector<32x128xf32>
    %21 = arith.truncf %20 : vector<32x128xf32> to vector<32x128xbf16>
    %c0_11 = arith.constant 0 : index
    %c0_12 = arith.constant 0 : index
    %22 = vector.load %arg5[%c0_11, %c0_12] : memref<128x128xbf16, #tpu.memory_space<vmem>>, vector<128x128xbf16>
    %cst_13 = arith.constant dense<0.000000e+00> : vector<32x128xf32>
    %23 = tpu.matmul %21, %22, %cst_13 {dimension_numbers = #tpu.dot_dimension_numbers<[1], [0], [0], [1], [0, 0, 1, 1], [], []>} : vector<32x128xbf16>, vector<128x128xbf16>, vector<32x128xf32> -> vector<32x128xf32>
    %c0_14 = arith.constant 0 : index
    %c0_15 = arith.constant 0 : index
    %24 = vector.load %arg6[%c0_14, %c0_15] : memref<1x128xf32, #tpu.memory_space<vmem>>, vector<1x128xf32>
    %25 = vector.broadcast %24 : vector<1x128xf32> to vector<32x128xf32>
    %26 = arith.addf %23, %25 : vector<32x128xf32>
    %cst_16 = arith.constant 0.000000e+00 : f32
    %27 = vector.broadcast %cst_16 : f32 to vector<32x1xf32>
    %28 = arith.cmpf ogt, %1, %27 : vector<32x1xf32>
    %c0_17 = arith.constant 0 : index
    %c0_18 = arith.constant 0 : index
    %29 = vector.load %arg7[%c0_17, %c0_18] : memref<1x128xf32, #tpu.memory_space<vmem>>, vector<1x128xf32>
    %30 = vector.shape_cast %28 : vector<32x1xi1> to vector<32x1xi1>
    %31 = vector.broadcast %30 : vector<32x1xi1> to vector<32x128xi1>
    %32 = vector.shape_cast %29 : vector<1x128xf32> to vector<1x128xf32>
    %33 = vector.broadcast %32 : vector<1x128xf32> to vector<32x128xf32>
    %34 = arith.select %31, %33, %26 : vector<32x128xi1>, vector<32x128xf32>
    %35 = arith.truncf %34 : vector<32x128xf32> to vector<32x128xbf16>
    %c0_19 = arith.constant 0 : index
    %c0_20 = arith.constant 0 : index
    %36 = vector.load %arg10[%c0_19, %c0_20] : memref<32x128xbf16, #tpu.memory_space<vmem>>, vector<32x128xbf16>
    tpu.vector_store %arg10[%c0_19, %c0_20], %35 {strides = array<i32>} : memref<32x128xbf16, #tpu.memory_space<vmem>>, vector<32x128xbf16>,
    %37 = arith.truncf %26 : vector<32x128xf32> to vector<32x128xbf16>
    %c0_21 = arith.constant 0 : index
    %c0_22 = arith.constant 0 : index
    %38 = vector.load %arg11[%c0_21, %c0_22] : memref<32x128xbf16, #tpu.memory_space<vmem>>, vector<32x128xbf16>
    tpu.vector_store %arg11[%c0_21, %c0_22], %37 {strides = array<i32>} : memref<32x128xbf16, #tpu.memory_space<vmem>>, vector<32x128xbf16>,
    %39 = arith.truncf %34 : vector<32x128xf32> to vector<32x128xbf16>
    %c0_23 = arith.constant 0 : index
    %c0_24 = arith.constant 0 : index
    %40 = vector.load %arg8[%c0_23, %c0_24] : memref<128x128xbf16, #tpu.memory_space<vmem>>, vector<128x128xbf16>
    %cst_25 = arith.constant dense<0.000000e+00> : vector<32x128xf32>
    %41 = tpu.matmul %39, %40, %cst_25 {dimension_numbers = #tpu.dot_dimension_numbers<[1], [0], [0], [1], [0, 0, 1, 1], [], []>} : vector<32x128xbf16>, vector<128x128xbf16>, vector<32x128xf32> -> vector<32x128xf32>
    %c0_26 = arith.constant 0 : index
    %c0_27 = arith.constant 0 : index
    %42 = vector.load %arg9[%c0_26, %c0_27] : memref<1x128xf32, #tpu.memory_space<vmem>>, vector<1x128xf32>
    %43 = vector.broadcast %42 : vector<1x128xf32> to vector<32x128xf32>
    %44 = arith.addf %41, %43 : vector<32x128xf32>
    %45 = arith.subf %0, %44 : vector<32x128xf32>
    %46 = math.absf %45 : vector<32x128xf32>
    %cst_28 = arith.constant dense<0.000000e+00> : vector<32xf32>
    %47 = vector.multi_reduction <add>, %46, %cst_28 [1] : vector<32x128xf32> to vector<32xf32>
    %48 = vector.shape_cast %47 : vector<32xf32> to vector<32x1xf32>
    %49 = arith.mulf %48, %1 : vector<32x1xf32>
    %50 = vector.shape_cast %49 : vector<32x1xf32> to vector<1x32x1xf32>
    %cst_29 = arith.constant dense<0.000000e+00> : vector<1xf32>
    %51 = vector.multi_reduction <add>, %50, %cst_29 [1, 2] : vector<1x32x1xf32> to vector<1xf32>
    %52 = vector.shape_cast %51 : vector<1xf32> to vector<1x1x1xf32>
    %53 = vector.extract %52[0, 0, 0] : f32 from vector<1x1x1xf32>
    %54 = vector.broadcast %53 : f32 to vector<1x1x128xf32>
    %c0_30 = arith.constant 0 : index
    %c0_31 = arith.constant 0 : index
    %c0_32 = arith.constant 0 : index
    %55 = vector.load %arg12[%c0_30, %c0_31, %c0_32] : memref<1x1x128xf32, #tpu.memory_space<vmem>>, vector<1x1x128xf32>
    tpu.vector_store %arg12[%c0_30, %c0_31, %c0_32], %54 {strides = array<i32>} : memref<1x1x128xf32, #tpu.memory_space<vmem>>, vector<1x1x128xf32>,
    return
  }
  func.func @transform_0(%arg0: i32) -> (i32, i32) {
    %c0_i32 = arith.constant 0 : i32
    %c0_i32_0 = arith.constant 0 : i32
    return %arg0, %c0_i32 : i32, i32
  }
  func.func @transform_1(%arg0: i32) -> (i32, i32) {
    %c0_i32 = arith.constant 0 : i32
    %c0_i32_0 = arith.constant 0 : i32
    return %arg0, %c0_i32 : i32, i32
  }
  func.func @transform_2(%arg0: i32) -> (i32, i32) {
    %c0_i32 = arith.constant 0 : i32
    %c0_i32_0 = arith.constant 0 : i32
    %c0_i32_1 = arith.constant 0 : i32
    return %c0_i32, %c0_i32_0 : i32, i32
  }
  func.func @transform_3(%arg0: i32) -> (i32, i32) {
    %c0_i32 = arith.constant 0 : i32
    %c0_i32_0 = arith.constant 0 : i32
    %c0_i32_1 = arith.constant 0 : i32
    return %c0_i32, %c0_i32_0 : i32, i32
  }
  func.func @transform_4(%arg0: i32) -> (i32, i32) {
    %c0_i32 = arith.constant 0 : i32
    %c0_i32_0 = arith.constant 0 : i32
    %c0_i32_1 = arith.constant 0 : i32
    return %c0_i32, %c0_i32_0 : i32, i32
  }
  func.func @transform_5(%arg0: i32) -> (i32, i32) {
    %c0_i32 = arith.constant 0 : i32
    %c0_i32_0 = arith.constant 0 : i32
    %c0_i32_1 = arith.constant 0 : i32
    return %c0_i32, %c0_i32_0 : i32, i32
  }
  func.func @transform_6(%arg0: i32) -> (i32, i32) {
    %c0_i32 = arith.constant 0 : i32
    %c0_i32_0 = arith.constant 0 : i32
    %c0_i32_1 = arith.constant 0 : i32
    return %c0_i32, %c0_i32_0 : i32, i32
  }
  func.func @transform_7(%arg0: i32) -> (i32, i32) {
    %c0_i32 = arith.constant 0 : i32
    %c0_i32_0 = arith.constant 0 : i32
    %c0_i32_1 = arith.constant 0 : i32
    return %c0_i32, %c0_i32_0 : i32, i32
  }
  func.func @transform_8(%arg0: i32) -> (i32, i32) {
    %c0_i32 = arith.constant 0 : i32
    %c0_i32_0 = arith.constant 0 : i32
    %c0_i32_1 = arith.constant 0 : i32
    return %c0_i32, %c0_i32_0 : i32, i32
  }
  func.func @transform_9(%arg0: i32) -> (i32, i32) {
    %c0_i32 = arith.constant 0 : i32
    %c0_i32_0 = arith.constant 0 : i32
    return %arg0, %c0_i32 : i32, i32
  }
  func.func @transform_10(%arg0: i32) -> (i32, i32) {
    %c0_i32 = arith.constant 0 : i32
    %c0_i32_0 = arith.constant 0 : i32
    return %arg0, %c0_i32 : i32, i32
  }
  func.func @transform_11(%arg0: i32) -> (i32, i32, i32) {
    %c0_i32 = arith.constant 0 : i32
    %c0_i32_0 = arith.constant 0 : i32
    %c0_i32_1 = arith.constant 0 : i32
    return %arg0, %c0_i32, %c0_i32_0 : i32, i32, i32
  }
}

module attributes {stable_mosaic.version = 11 : i64} {
  func.func @_info_nce_kernel(%arg0: i32, %arg1: memref<4x512xbf16, #tpu.memory_space<vmem>>, %arg2: memref<1x128xf32, #tpu.memory_space<vmem>>, %arg3: memref<4x4xf32, #tpu.memory_space<vmem>>) attributes {dimension_semantics = [#tpu.dimension_semantics<arbitrary>], iteration_bounds = array<i64: 1>, scalar_prefetch = 0 : i64, scratch_operands = 1 : i64, tpu.core_type = #tpu.core_type<tc>, window_params = [{transform_indices = @transform_0, window_bounds = array<i64: 4, 512>}, {pipeline_mode = #tpu.pipeline_mode<synchronous>, transform_indices = @transform_1, window_bounds = array<i64: 1, 128>}]} {
    %c0_i32 = arith.constant 0 : i32
    %0 = arith.cmpi eq, %arg0, %c0_i32 : i32
    %1 = arith.extui %0 : i1 to i32
    %c0_i32_0 = arith.constant 0 : i32
    %2 = arith.cmpi ne, %1, %c0_i32_0 : i32
    scf.if %2 {
      %cst_8 = arith.constant 0.000000e+00 : f32
      %11 = vector.broadcast %cst_8 : f32 to vector<4x4xf32>
      %c0_9 = arith.constant 0 : index
      %c0_10 = arith.constant 0 : index
      %12 = vector.load %arg3[%c0_9, %c0_10] : memref<4x4xf32, #tpu.memory_space<vmem>>, vector<4x4xf32>
      tpu.vector_store %arg3[%c0_9, %c0_10], %11 {strides = array<i32>} : memref<4x4xf32, #tpu.memory_space<vmem>>, vector<4x4xf32>,
    } else {
    }
    %c0 = arith.constant 0 : index
    %c0_1 = arith.constant 0 : index
    %3 = vector.load %arg1[%c0, %c0_1] : memref<4x512xbf16, #tpu.memory_space<vmem>>, vector<4x512xbf16>
    %c0_2 = arith.constant 0 : index
    %c0_3 = arith.constant 0 : index
    %4 = vector.load %arg3[%c0_2, %c0_3] : memref<4x4xf32, #tpu.memory_space<vmem>>, vector<4x4xf32>
    %cst = arith.constant dense<0.000000e+00> : vector<4x4xf32>
    %5 = tpu.matmul %3, %3, %cst {dimension_numbers = #tpu.dot_dimension_numbers<[1], [1], [0], [0], [0, 0, 1, 0], [], []>} : vector<4x512xbf16>, vector<4x512xbf16>, vector<4x4xf32> -> vector<4x4xf32>
    %6 = arith.addf %4, %5 : vector<4x4xf32>
    %c0_4 = arith.constant 0 : index
    %c0_5 = arith.constant 0 : index
    %7 = vector.load %arg3[%c0_4, %c0_5] : memref<4x4xf32, #tpu.memory_space<vmem>>, vector<4x4xf32>
    tpu.vector_store %arg3[%c0_4, %c0_5], %6 {strides = array<i32>} : memref<4x4xf32, #tpu.memory_space<vmem>>, vector<4x4xf32>,
    %c0_i32_6 = arith.constant 0 : i32
    %8 = arith.cmpi eq, %arg0, %c0_i32_6 : i32
    %9 = arith.extui %8 : i1 to i32
    %c0_i32_7 = arith.constant 0 : i32
    %10 = arith.cmpi ne, %9, %c0_i32_7 : i32
    scf.if %10 {
      %c0_8 = arith.constant 0 : index
      %c0_9 = arith.constant 0 : index
      %11 = vector.load %arg3[%c0_8, %c0_9] : memref<4x4xf32, #tpu.memory_space<vmem>>, vector<4x4xf32>
      %cst_10 = arith.constant 14.2857141 : f32
      %12 = vector.broadcast %cst_10 : f32 to vector<4x4xf32>
      %13 = arith.mulf %11, %12 : vector<4x4xf32>
      %14 = tpu.iota {dimensions = array<i32: 0>} : vector<4x4xi32>
      %15 = tpu.iota {dimensions = array<i32: 1>} : vector<4x4xi32>
      %16 = arith.cmpi eq, %14, %15 : vector<4x4xi32>
      %cst_11 = arith.constant 1.000000e+09 : f32
      %cst_12 = arith.constant 0.000000e+00 : f32
      %17 = vector.broadcast %cst_11 : f32 to vector<4x4xf32>
      %18 = vector.broadcast %cst_12 : f32 to vector<4x4xf32>
      %19 = arith.select %16, %17, %18 : vector<4x4xi1>, vector<4x4xf32>
      %20 = arith.subf %13, %19 : vector<4x4xf32>
      %cst_13 = arith.constant dense<0xFF800000> : vector<4xf32>
      %21 = vector.multi_reduction <maximumf>, %20, %cst_13 [1] : vector<4x4xf32> to vector<4xf32>
      %22 = vector.shape_cast %21 : vector<4xf32> to vector<4x1xf32>
      %23 = vector.broadcast %22 : vector<4x1xf32> to vector<4x4xf32>
      %24 = arith.subf %20, %23 : vector<4x4xf32>
      %25 = math.exp %24 : vector<4x4xf32>
      %cst_14 = arith.constant dense<0.000000e+00> : vector<4xf32>
      %26 = vector.multi_reduction <add>, %25, %cst_14 [1] : vector<4x4xf32> to vector<4xf32>
      %27 = vector.shape_cast %26 : vector<4xf32> to vector<4x1xf32>
      %28 = math.log %27 : vector<4x1xf32>
      %29 = arith.addf %22, %28 : vector<4x1xf32>
      %c2_i32 = arith.constant 2 : i32
      %30 = vector.broadcast %c2_i32 : i32 to vector<4x4xi32>
      %31 = arith.cmpi slt, %14, %30 : vector<4x4xi32>
      %c2_i32_15 = arith.constant 2 : i32
      %32 = vector.broadcast %c2_i32_15 : i32 to vector<4x4xi32>
      %33 = arith.addi %14, %32 : vector<4x4xi32>
      %c2_i32_16 = arith.constant 2 : i32
      %34 = vector.broadcast %c2_i32_16 : i32 to vector<4x4xi32>
      %35 = arith.subi %14, %34 : vector<4x4xi32>
      %36 = arith.select %31, %33, %35 : vector<4x4xi1>, vector<4x4xi32>
      %37 = arith.cmpi eq, %15, %36 : vector<4x4xi32>
      %cst_17 = arith.constant 0.000000e+00 : f32
      %38 = vector.broadcast %cst_17 : f32 to vector<4x4xf32>
      %39 = arith.select %37, %20, %38 : vector<4x4xi1>, vector<4x4xf32>
      %cst_18 = arith.constant dense<0.000000e+00> : vector<4xf32>
      %40 = vector.multi_reduction <add>, %39, %cst_18 [1] : vector<4x4xf32> to vector<4xf32>
      %41 = vector.shape_cast %40 : vector<4xf32> to vector<4x1xf32>
      %42 = arith.subf %29, %41 : vector<4x1xf32>
      %43 = vector.shape_cast %42 : vector<4x1xf32> to vector<1x4x1xf32>
      %cst_19 = arith.constant dense<0.000000e+00> : vector<1xf32>
      %44 = vector.multi_reduction <add>, %43, %cst_19 [1, 2] : vector<1x4x1xf32> to vector<1xf32>
      %45 = vector.shape_cast %44 : vector<1xf32> to vector<1x1x1xf32>
      %46 = vector.extract %45[0, 0, 0] : f32 from vector<1x1x1xf32>
      %cst_20 = arith.constant 4.000000e+00 : f32
      %47 = arith.divf %46, %cst_20 : f32
      %48 = vector.broadcast %47 : f32 to vector<1x128xf32>
      %c0_21 = arith.constant 0 : index
      %c0_22 = arith.constant 0 : index
      %49 = vector.load %arg2[%c0_21, %c0_22] : memref<1x128xf32, #tpu.memory_space<vmem>>, vector<1x128xf32>
      tpu.vector_store %arg2[%c0_21, %c0_22], %48 {strides = array<i32>} : memref<1x128xf32, #tpu.memory_space<vmem>>, vector<1x128xf32>,
    } else {
    }
    return
  }
  func.func @transform_0(%arg0: i32) -> (i32, i32) {
    %c0_i32 = arith.constant 0 : i32
    %c0_i32_0 = arith.constant 0 : i32
    return %c0_i32, %arg0 : i32, i32
  }
  func.func @transform_1(%arg0: i32) -> (i32, i32) {
    %c0_i32 = arith.constant 0 : i32
    %c0_i32_0 = arith.constant 0 : i32
    %c0_i32_1 = arith.constant 0 : i32
    return %c0_i32, %c0_i32_0 : i32, i32
  }
}

</mosaic_0001>

<llo_original>
// kernel: _lambda_.3
$region0: #{_lambda_.3}
  #allocation0 [shape = 'u32[]', space=smem, size = 0x4, offset = 0x4, fixed_abs, tag = 'smem constant byte address 0x4 - core index']
  #allocation1 [shape = 'u32[144,128]{1,0:T(1,128)}', space=vmem, size = 0x12000, scoped, tag = 'internal scratch']
  #allocation2 [shape = 'f32[4,4]{1,0:T(4,128)}', space=vmem, size = 0x800, scoped, tag = 'scratch operand']
  %s0 = inlined_call_operand.vmem [shape: bf16[4,512], index: 0, kind: input, shape index: {}]
  %s1 = inlined_call_operand.vmem [shape: f32[1,128], index: 1, kind: output, shape index: {}]
  %s2 = sld [smem:[#allocation0]]
  $region22: #{_lambda_.3} parent=0
    _
  %s4 = ssub.s32 1, %s2
  %s5 = scalar_select 0, %s4, %s2
  // Predicated region
  $region2: #{_lambda_.3} parent=0 // pred_check
    _
  $region3: #{_lambda_.3} parent=0 // pred_check_branch
    %7 = sbr.rel (0) target = $region5
  $region4: #{_lambda_.3} parent=0 // pred_region
    _
  $region5: #{_lambda_.3} parent=0 // pred_fallthru
    _
  %p9 = scmp.eq.s32.totalorder 0, 0
  // Predicated region
  $region6: #{_lambda_.3} parent=0 // pred_check
    %p10 = pneg %p9
  $region7: #{_lambda_.3} parent=0 // pred_check_branch
    %12 = sbr.rel (%p10) target = $region9
  $region8: #{_lambda_.3} parent=0 // pred_region
    %vm13 = vcmask 27648
    %14 = vst.msk [vmem:[#allocation2] sm:$0xf] %vm13, 0.0
  $region9: #{_lambda_.3} parent=0 // pred_fallthru
    _
  %v15 = vld [vmem:[%s0] sm:$0xff]
  %v16 = vld [vmem:[#allocation2] sm:$0xf]
  %v18 = vcombine.high %v15, %v15
  %v20 = vunpack.c.l.s4 1983009808
  %v21 = vunpack.c.0.s8 %v20
  %v22 = vlaneseq
  %v23 = vshrl.u32 %v22, 7
  %v24 = vsub.s32 %v21, %v23
  %v25 = vrot.slane %v15, %v24
  %v27 = vunpack.c.l.s4 1983009808
  %v28 = vunpack.c.0.s8 %v27
  %v29 = vlaneseq
  %v30 = vshrl.u32 %v29, 7
  %v31 = vsub.s32 %v28, %v30
  %v32 = vrot.slane %v18, %v31
  %v33 = vcombine.high %v25, %v25
  %v34 = vcombine.high %v32, %v32
  %39 = vmatprep.subr.bf16.mxu0 %v33
  %40 = vmatpush1.bf16.xpose.msra.mxu0 %v25
  %41 = vmatprep.subr.bf16.mxu0 0
  %42 = vmatpush1.bf16.xpose.msra.mxu0 0
  %43 = vmatprep.subr.bf16.mxu0 0
  %44 = vmatpush1.bf16.xpose.msra.mxu0 0
  %45 = vmatprep.subr.bf16.mxu0 0
  %46 = vmatpush1.bf16.xpose.msra.mxu0 0
  %47 = vmatprep.subr.bf16.mxu0 0
  %48 = vmatpush1.bf16.xpose.msra.mxu0 0
  %49 = vmatprep.subr.bf16.mxu0 0
  %50 = vmatpush1.bf16.xpose.msra.mxu0 0
  %51 = vmatprep.subr.bf16.mxu0 0
  %52 = vmatpush1.bf16.xpose.msra.mxu0 0
  %53 = vmatprep.subr.bf16.mxu0 0
  %54 = vmatpush1.bf16.xpose.msra.mxu0 0
  %55 = vmatprep.subr.bf16.mxu0 0
  %56 = vmatpush1.bf16.xpose.msra.mxu0 0
  %57 = vmatprep.subr.bf16.mxu0 0
  %58 = vmatpush1.bf16.xpose.msra.mxu0 0
  %59 = vmatprep.subr.bf16.mxu0 0
  %60 = vmatpush1.bf16.xpose.msra.mxu0 0
  %61 = vmatprep.subr.bf16.mxu0 0
  %62 = vmatpush1.bf16.xpose.msra.mxu0 0
  %63 = vmatprep.subr.bf16.mxu0 0
  %64 = vmatpush1.bf16.xpose.msra.mxu0 0
  %65 = vmatprep.subr.bf16.mxu0 0
  %66 = vmatpush1.bf16.xpose.msra.mxu0 0
  %67 = vmatprep.subr.bf16.mxu0 0
  %68 = vmatpush1.bf16.xpose.msra.mxu0 0
  %69 = vmatprep.subr.bf16.mxu0 0
  %70 = vmatpush1.bf16.xpose.msra.mxu0 0
  %71 = vmatprep.mubr.bf16.mxu0 %v33
  %72 = vmatmul.mubr.bf16.gmra.mrb[0].mxu0 %v25
  %v73 = vpop.f32.mrb[0].mxu0
  %v74 = vadd.f32 0.0, %v73
  %v75 = vpop.f32.mrb[0].mxu0
  %v76 = vpop.f32.mrb[0].mxu0
  %v77 = vpop.f32.mrb[0].mxu0
  %78 = vdwg.mxu0
  %79 = vmatprep.subr.bf16.mxu0 %v34
  %80 = vmatpush1.bf16.xpose.msra.mxu0 %v32
  %81 = vmatprep.subr.bf16.mxu0 0
  %82 = vmatpush1.bf16.xpose.msra.mxu0 0
  %83 = vmatprep.subr.bf16.mxu0 0
  %84 = vmatpush1.bf16.xpose.msra.mxu0 0
  %85 = vmatprep.subr.bf16.mxu0 0
  %86 = vmatpush1.bf16.xpose.msra.mxu0 0
  %87 = vmatprep.subr.bf16.mxu0 0
  %88 = vmatpush1.bf16.xpose.msra.mxu0 0
  %89 = vmatprep.subr.bf16.mxu0 0
  %90 = vmatpush1.bf16.xpose.msra.mxu0 0
  %91 = vmatprep.subr.bf16.mxu0 0
  %92 = vmatpush1.bf16.xpose.msra.mxu0 0
  %93 = vmatprep.subr.bf16.mxu0 0
  %94 = vmatpush1.bf16.xpose.msra.mxu0 0
  %95 = vmatprep.subr.bf16.mxu0 0
  %96 = vmatpush1.bf16.xpose.msra.mxu0 0
  %97 = vmatprep.subr.bf16.mxu0 0
  %98 = vmatpush1.bf16.xpose.msra.mxu0 0
  %99 = vmatprep.subr.bf16.mxu0 0
  %100 = vmatpush1.bf16.xpose.msra.mxu0 0
  %101 = vmatprep.subr.bf16.mxu0 0
  %102 = vmatpush1.bf16.xpose.msra.mxu0 0
  %103 = vmatprep.subr.bf16.mxu0 0
  %104 = vmatpush1.bf16.xpose.msra.mxu0 0
  %105 = vmatprep.subr.bf16.mxu0 0
  %106 = vmatpush1.bf16.xpose.msra.mxu0 0
  %107 = vmatprep.subr.bf16.mxu0 0
  %108 = vmatpush1.bf16.xpose.msra.mxu0 0
  %109 = vmatprep.subr.bf16.mxu0 0
  %110 = vmatpush1.bf16.xpose.msra.mxu0 0
  %111 = vmatprep.mubr.bf16.mxu0 %v34
  %112 = vmatmul.mubr.bf16.gmra.mrb[0].mxu0 %v32
  %v113 = vpop.f32.mrb[0].mxu0
  %v114 = vadd.f32 %v74, %v113
  %v115 = vpop.f32.mrb[0].mxu0
  %v116 = vpop.f32.mrb[0].mxu0
  %v117 = vpop.f32.mrb[0].mxu0
  %118 = vdwg.mxu0
  %v119 = vadd.f32 %v16, %v114
  %vm120 = vcmask 27648
  %121 = vst.msk [vmem:[#allocation2] sm:$0xf] %vm120, %v119
  // Predicated region
  $region10: #{_lambda_.3} parent=0 // pred_check
    %p122 = pneg %p9
  $region11: #{_lambda_.3} parent=0 // pred_check_branch
    %124 = sbr.rel (%p122) target = $region13
  $region12: #{_lambda_.3} parent=0 // pred_region
    %v125 = vld [vmem:[#allocation2] sm:$0xf]
    %v126 = vmul.f32 %v125, 14.285714
    %v127 = vlaneseq
    %v128 = vshrl.u32 %v127, 7
    %v129 = vlaneseq
    %v130 = vand.u32 %v129, 127
    %vm131 = vcmp.eq.s32.totalorder %v128, %v130
    %v132 = vsel %vm131, 1e+09, 0.0
    %v133 = vsub.f32 %v126, %v132
    %v134 = vsel %vm120, %v133, -inf
    %135 = vmax.xlane.f32.xlu0 %v134
    %v136 = vpop.xlane.xlu0 %135
    %v137 = vsub.f32 %v133, %v136
    %v138 = vmul.f32 %v137, 1.442695
    %v139 = vpow.pop %v138
    %v140 = vsel %vm120, %v139, 0.0
    %141 = vadd.xlane.f32.xlu0 %v140
    %v142 = vpop.xlane.xlu0 %141
    %v143 = vlog2.pop %v142
    %v144 = vmul.f32 %v143, 0.6931472
    %v145 = vadd.f32 %v136, %v144
    %vm146 = vcmp.lt.s32.totalorder %v128, 2
    %v147 = vadd.s32 %v128, 2
    %v148 = vsub.s32 %v128, 2
    %v149 = vsel %vm146, %v147, %v148
    %vm150 = vcmp.eq.s32.totalorder %v130, %v149
    %v151 = vsel %vm150, %v133, 0.0
    %v152 = vsel %vm120, %v151, 0.0
    %153 = vadd.xlane.f32.xlu0 %v152
    %v154 = vpop.xlane.xlu0 %153
    %v155 = vsub.f32 %v145, %v154
    %vm156 = vcmask 3072
    %v157 = vsel %vm156, %v155, 0.0
    %158 = vadd.xlane.f32.xlu0 %v157
    %v159 = vpop.xlane.xlu0 %158
    %v160 = vrot.slane %v159, 4
    %v161 = vadd.f32 %v159, %v160
    %v162 = vrot.slane %v161, 2
    %v163 = vadd.f32 %v161, %v162
    %v164 = vrot.slane %v163, 1
    %v165 = vadd.f32 %v163, %v164
    %s166 = vtos %v165
    %v167 = vrcp.pop 4.0
    %s168 = vtos %v167
    %s169 = smul.f32 %s166, %s168
    %v170 = vstv %s169
    %171 = vst [vmem:[%s1] sm:$0x1] %v170
  $region13: #{_lambda_.3} parent=0 // pred_fallthru
    _
  // Predicated region
  $region14: #{_lambda_.3} parent=0 // pred_check
    _
  $region15: #{_lambda_.3} parent=0 // pred_check_branch
    %173 = sbr.rel (0) target = $region17
  $region16: #{_lambda_.3} parent=0 // pred_region
    _
  $region17: #{_lambda_.3} parent=0 // pred_fallthru
    _
  // Predicated region
  $region18: #{_lambda_.3} parent=0 // pred_check
    _
  $region19: #{_lambda_.3} parent=0 // pred_check_branch
    %175 = sbr.rel (0) target = $region21
  $region20: #{_lambda_.3} parent=0 // pred_region
    _
  $region21: #{_lambda_.3} parent=0 // pred_fallthru
    _

// kernel: _lambda_.2
$region0: #{_lambda_.2}
  #allocation0 [shape = 'u32[]', space=smem, size = 0x4, offset = 0x4, fixed_abs, tag = 'smem constant byte address 0x4 - core index']
  #allocation1 [shape = 'u32[144,128]{1,0:T(1,128)}', space=vmem, size = 0x12000, scoped, tag = 'internal scratch']
  %s0 = inlined_call_operand.vmem [shape: f32[32,128], index: 0, kind: input, shape index: {}]
  %s1 = inlined_call_operand.vmem [shape: f32[32,1], index: 1, kind: input, shape index: {}]
  %s2 = inlined_call_operand.vmem [shape: bf16[128,128], index: 2, kind: input, shape index: {}]
  %s3 = inlined_call_operand.vmem [shape: f32[1,128], index: 3, kind: input, shape index: {}, may-alias: {3,5}]
  %s4 = inlined_call_operand.vmem [shape: bf16[128,128], index: 4, kind: input, shape index: {}]
  %s5 = inlined_call_operand.vmem [shape: f32[1,128], index: 5, kind: input, shape index: {}, may-alias: {3,5}]
  %s6 = inlined_call_operand.vmem [shape: f32[1,128], index: 6, kind: input, shape index: {}]
  %s7 = inlined_call_operand.vmem [shape: bf16[128,128], index: 7, kind: input, shape index: {}]
  %s8 = inlined_call_operand.vmem [shape: f32[1,128], index: 8, kind: input, shape index: {}]
  %s9 = inlined_call_operand.vmem [shape: bf16[32,128], index: 9, kind: output, shape index: {0}]
  %s10 = inlined_call_operand.vmem [shape: bf16[32,128], index: 10, kind: output, shape index: {1}]
  %s11 = inlined_call_operand.vmem [shape: f32[1,1,128], index: 11, kind: output, shape index: {2}]
  %12 = xla_tuple %s9, %s10, %s11
  %s13 = sld [smem:[#allocation0]]
  $region62: #{_lambda_.2} parent=0
    _
  %s15 = ssub.s32 1, %s13
  %s16 = scalar_select 0, %s15, %s13
  // Predicated region
  $region2: #{_lambda_.2} parent=0 // pred_check
    _
  $region3: #{_lambda_.2} parent=0 // pred_check_branch
    %18 = sbr.rel (0) target = $region5
  $region4: #{_lambda_.2} parent=0 // pred_region
    _
  $region5: #{_lambda_.2} parent=0 // pred_fallthru
    _
  // Predicated region
  $region6: #{_lambda_.2} parent=0 // pred_check
    _
  $region7: #{_lambda_.2} parent=0 // pred_check_branch
    %20 = sbr.rel (0) target = $region9
  $region8: #{_lambda_.2} parent=0 // pred_region
    _
  $region9: #{_lambda_.2} parent=0 // pred_fallthru
    _
  // Predicated region
  $region10: #{_lambda_.2} parent=0 // pred_check
    _
  $region11: #{_lambda_.2} parent=0 // pred_check_branch
    %22 = sbr.rel (0) target = $region13
  $region12: #{_lambda_.2} parent=0 // pred_region
    _
  $region13: #{_lambda_.2} parent=0 // pred_fallthru
    _
  // Predicated region
  $region14: #{_lambda_.2} parent=0 // pred_check
    _
  $region15: #{_lambda_.2} parent=0 // pred_check_branch
    %24 = sbr.rel (0) target = $region17
  $region16: #{_lambda_.2} parent=0 // pred_region
    _
  $region17: #{_lambda_.2} parent=0 // pred_fallthru
    _
  // Predicated region
  $region18: #{_lambda_.2} parent=0 // pred_check
    _
  $region19: #{_lambda_.2} parent=0 // pred_check_branch
    %26 = sbr.rel (0) target = $region21
  $region20: #{_lambda_.2} parent=0 // pred_region
    _
  $region21: #{_lambda_.2} parent=0 // pred_fallthru
    _
  // Predicated region
  $region22: #{_lambda_.2} parent=0 // pred_check
    _
  $region23: #{_lambda_.2} parent=0 // pred_check_branch
    %28 = sbr.rel (0) target = $region25
  $region24: #{_lambda_.2} parent=0 // pred_region
    _
  $region25: #{_lambda_.2} parent=0 // pred_fallthru
    _
  // Predicated region
  $region26: #{_lambda_.2} parent=0 // pred_check
    _
  $region27: #{_lambda_.2} parent=0 // pred_check_branch
    %30 = sbr.rel (0) target = $region29
  $region28: #{_lambda_.2} parent=0 // pred_region
    _
  $region29: #{_lambda_.2} parent=0 // pred_fallthru
    _
  // Predicated region
  $region30: #{_lambda_.2} parent=0 // pred_check
    _
  $region31: #{_lambda_.2} parent=0 // pred_check_branch
    %32 = sbr.rel (0) target = $region33
  $region32: #{_lambda_.2} parent=0 // pred_region
    _
  $region33: #{_lambda_.2} parent=0 // pred_fallthru
    _
  // Predicated region
  $region34: #{_lambda_.2} parent=0 // pred_check
    _
  $region35: #{_lambda_.2} parent=0 // pred_check_branch
    %34 = sbr.rel (0) target = $region37
  $region36: #{_lambda_.2} parent=0 // pred_region
    _
  $region37: #{_lambda_.2} parent=0 // pred_fallthru
    _
  %v36 = vld [vmem:[%s0] sm:$0xff]
  %v37 = vld [vmem:[%s0 + $0x8] sm:$0xff]
  %v38 = vld [vmem:[%s0 + $0x10] sm:$0xff]
  %v39 = vld [vmem:[%s0 + $0x18] sm:$0xff]
  %v40 = vld [vmem:[%s1] sm:$0xff]
  %v41 = vld [vmem:[%s1 + $0x8] sm:$0xff]
  %v42 = vld [vmem:[%s1 + $0x10] sm:$0xff]
  %v43 = vld [vmem:[%s1 + $0x18] sm:$0xff]
  %v44 = vpack.c.bf16 %v37, %v36
  %v45 = vpack.c.bf16 %v39, %v38
  %v46 = vld [vmem:[%s2] sm:$0xf]
  %v47 = vld [vmem:[%s2 + $0x4] sm:$0xf]
  %v48 = vld [vmem:[%s2 + $0x8] sm:$0xf]
  %v49 = vld [vmem:[%s2 + $0xc] sm:$0xf]
  %v50 = vld [vmem:[%s2 + $0x10] sm:$0xf]
  %v51 = vld [vmem:[%s2 + $0x14] sm:$0xf]
  %v52 = vld [vmem:[%s2 + $0x18] sm:$0xf]
  %v53 = vld [vmem:[%s2 + $0x1c] sm:$0xf]
  %v54 = vld [vmem:[%s2 + $0x20] sm:$0xf]
  %v55 = vld [vmem:[%s2 + $0x24] sm:$0xf]
  %v56 = vld [vmem:[%s2 + $0x28] sm:$0xf]
  %v57 = vld [vmem:[%s2 + $0x2c] sm:$0xf]
  %v58 = vld [vmem:[%s2 + $0x30] sm:$0xf]
  %v59 = vld [vmem:[%s2 + $0x34] sm:$0xf]
  %v60 = vld [vmem:[%s2 + $0x38] sm:$0xf]
  %v61 = vld [vmem:[%s2 + $0x3c] sm:$0xf]
  %v62 = vld [vmem:[%s3] sm:$0x1]
  %v64 = vlaneseq
  %v65 = vshrl.u32 %v64, 7
  %v66 = vsub.s32 0, %v65
  %v67 = vrot.slane %v62, %v66
  %v85 = vunpack.c.l.b16 %v46
  %v86 = vunpack.c.l.b16 %v47
  %v87 = vunpack.c.l.b16 %v48
  %v88 = vunpack.c.l.b16 %v49
  %v89 = vunpack.c.l.b16 %v50
  %v90 = vunpack.c.l.b16 %v51
  %v91 = vunpack.c.l.b16 %v52
  %v92 = vunpack.c.l.b16 %v53
  %v93 = vunpack.c.l.b16 %v54
  %v94 = vunpack.c.l.b16 %v55
  %v95 = vunpack.c.l.b16 %v56
  %v96 = vunpack.c.l.b16 %v57
  %v97 = vunpack.c.l.b16 %v58
  %v98 = vunpack.c.l.b16 %v59
  %v99 = vunpack.c.l.b16 %v60
  %v100 = vunpack.c.l.b16 %v61
  %v101 = vpack.c.b16 %v86, %v85
  %v102 = vpack.c.b16 %v88, %v87
  %v103 = vpack.c.b16 %v90, %v89
  %v104 = vpack.c.b16 %v92, %v91
  %v105 = vpack.c.b16 %v94, %v93
  %v106 = vpack.c.b16 %v96, %v95
  %v107 = vpack.c.b16 %v98, %v97
  %v108 = vpack.c.b16 %v100, %v99
  %117 = vmatprep.subr.bf16.mxu0 0
  %118 = vmatpush1.bf16.msra.mxu0 %v101
  %119 = vmatprep.subr.bf16.mxu0 0
  %120 = vmatpush1.bf16.msra.mxu0 %v102
  %121 = vmatprep.subr.bf16.mxu0 0
  %122 = vmatpush1.bf16.msra.mxu0 %v103
  %123 = vmatprep.subr.bf16.mxu0 0
  %124 = vmatpush1.bf16.msra.mxu0 %v104
  %125 = vmatprep.subr.bf16.mxu0 0
  %126 = vmatpush1.bf16.msra.mxu0 %v105
  %127 = vmatprep.subr.bf16.mxu0 0
  %128 = vmatpush1.bf16.msra.mxu0 %v106
  %129 = vmatprep.subr.bf16.mxu0 0
  %130 = vmatpush1.bf16.msra.mxu0 %v107
  %131 = vmatprep.subr.bf16.mxu0 0
  %132 = vmatpush1.bf16.msra.mxu0 %v108
  %133 = vmatprep.subr.bf16.mxu0 0
  %134 = vmatpush1.bf16.msra.mxu0 0
  %135 = vmatprep.subr.bf16.mxu0 0
  %136 = vmatpush1.bf16.msra.mxu0 0
  %137 = vmatprep.subr.bf16.mxu0 0
  %138 = vmatpush1.bf16.msra.mxu0 0
  %139 = vmatprep.subr.bf16.mxu0 0
  %140 = vmatpush1.bf16.msra.mxu0 0
  %141 = vmatprep.subr.bf16.mxu0 0
  %142 = vmatpush1.bf16.msra.mxu0 0
  %143 = vmatprep.subr.bf16.mxu0 0
  %144 = vmatpush1.bf16.msra.mxu0 0
  %145 = vmatprep.subr.bf16.mxu0 0
  %146 = vmatpush1.bf16.msra.mxu0 0
  %147 = vmatprep.subr.bf16.mxu0 0
  %148 = vmatpush1.bf16.msra.mxu0 0
  %149 = vmatprep.mubr.bf16.mxu0 0
  %150 = vmatmul.mubr.bf16.gmra.mrb[0].mxu0 %v44
  %v151 = vpop.f32.mrb[0].mxu0
  %v152 = vadd.f32 %v67, %v151
  %v153 = vpop.f32.mrb[0].mxu0
  %v154 = vpop.f32.mrb[0].mxu0
  %v155 = vadd.f32 %v67, %v154
  %v156 = vpop.f32.mrb[0].mxu0
  %157 = vmatprep.mubr.bf16.mxu0 0
  %158 = vmatmul.mubr.bf16.gmra.mrb[0].mxu0 %v45
  %v159 = vpop.f32.mrb[0].mxu0
  %v160 = vadd.f32 %v67, %v159
  %v161 = vpop.f32.mrb[0].mxu0
  %v162 = vpop.f32.mrb[0].mxu0
  %v163 = vadd.f32 %v67, %v162
  %v164 = vpop.f32.mrb[0].mxu0
  %165 = vdwg.mxu0
  %v166 = vmul.f32 %v152, %v152
  %v167 = vmul.f32 %v155, %v155
  %v168 = vmul.f32 %v160, %v160
  %v169 = vmul.f32 %v163, %v163
  %v170 = vmul.f32 %v152, %v166
  %v171 = vmul.f32 %v155, %v167
  %v172 = vmul.f32 %v160, %v168
  %v173 = vmul.f32 %v163, %v169
  %v174 = vmul.f32 %v170, 0.044715
  %v175 = vmul.f32 %v171, 0.044715
  %v176 = vmul.f32 %v172, 0.044715
  %v177 = vmul.f32 %v173, 0.044715
  %v178 = vadd.f32 %v152, %v174
  %v179 = vadd.f32 %v155, %v175
  %v180 = vadd.f32 %v160, %v176
  %v181 = vadd.f32 %v163, %v177
  %v182 = vmul.f32 %v178, 0.7978846
  %v183 = vmul.f32 %v179, 0.7978846
  %v184 = vmul.f32 %v180, 0.7978846
  %v185 = vmul.f32 %v181, 0.7978846
  %v186 = vtanh.pop %v182
  %v187 = vtanh.pop %v183
  %v188 = vtanh.pop %v184
  %v189 = vtanh.pop %v185
  %v190 = vadd.f32 %v186, 1.0
  %v191 = vadd.f32 %v187, 1.0
  %v192 = vadd.f32 %v188, 1.0
  %v193 = vadd.f32 %v189, 1.0
  %v194 = vmul.f32 %v190, 0.5
  %v195 = vmul.f32 %v191, 0.5
  %v196 = vmul.f32 %v192, 0.5
  %v197 = vmul.f32 %v193, 0.5
  %v198 = vmul.f32 %v152, %v194
  %v199 = vmul.f32 %v155, %v195
  %v200 = vmul.f32 %v160, %v196
  %v201 = vmul.f32 %v163, %v197
  %v202 = vpack.c.bf16 %v199, %v198
  %v203 = vpack.c.bf16 %v201, %v200
  %v204 = vld [vmem:[%s4] sm:$0xf]
  %v205 = vld [vmem:[%s4 + $0x4] sm:$0xf]
  %v206 = vld [vmem:[%s4 + $0x8] sm:$0xf]
  %v207 = vld [vmem:[%s4 + $0xc] sm:$0xf]
  %v208 = vld [vmem:[%s4 + $0x10] sm:$0xf]
  %v209 = vld [vmem:[%s4 + $0x14] sm:$0xf]
  %v210 = vld [vmem:[%s4 + $0x18] sm:$0xf]
  %v211 = vld [vmem:[%s4 + $0x1c] sm:$0xf]
  %v212 = vld [vmem:[%s4 + $0x20] sm:$0xf]
  %v213 = vld [vmem:[%s4 + $0x24] sm:$0xf]
  %v214 = vld [vmem:[%s4 + $0x28] sm:$0xf]
  %v215 = vld [vmem:[%s4 + $0x2c] sm:$0xf]
  %v216 = vld [vmem:[%s4 + $0x30] sm:$0xf]
  %v217 = vld [vmem:[%s4 + $0x34] sm:$0xf]
  %v218 = vld [vmem:[%s4 + $0x38] sm:$0xf]
  %v219 = vld [vmem:[%s4 + $0x3c] sm:$0xf]
  %v220 = vld [vmem:[%s5] sm:$0x1]
  %v222 = vlaneseq
  %v223 = vshrl.u32 %v222, 7
  %v224 = vsub.s32 0, %v223
  %v225 = vrot.slane %v220, %v224
  %v243 = vunpack.c.l.b16 %v204
  %v244 = vunpack.c.l.b16 %v205
  %v245 = vunpack.c.l.b16 %v206
  %v246 = vunpack.c.l.b16 %v207
  %v247 = vunpack.c.l.b16 %v208
  %v248 = vunpack.c.l.b16 %v209
  %v249 = vunpack.c.l.b16 %v210
  %v250 = vunpack.c.l.b16 %v211
  %v251 = vunpack.c.l.b16 %v212
  %v252 = vunpack.c.l.b16 %v213
  %v253 = vunpack.c.l.b16 %v214
  %v254 = vunpack.c.l.b16 %v215
  %v255 = vunpack.c.l.b16 %v216
  %v256 = vunpack.c.l.b16 %v217
  %v257 = vunpack.c.l.b16 %v218
  %v258 = vunpack.c.l.b16 %v219
  %v259 = vpack.c.b16 %v244, %v243
  %v260 = vpack.c.b16 %v246, %v245
  %v261 = vpack.c.b16 %v248, %v247
  %v262 = vpack.c.b16 %v250, %v249
  %v263 = vpack.c.b16 %v252, %v251
  %v264 = vpack.c.b16 %v254, %v253
  %v265 = vpack.c.b16 %v256, %v255
  %v266 = vpack.c.b16 %v258, %v257
  %275 = vmatprep.subr.bf16.mxu0 0
  %276 = vmatpush1.bf16.msra.mxu0 %v259
  %277 = vmatprep.subr.bf16.mxu0 0
  %278 = vmatpush1.bf16.msra.mxu0 %v260
  %279 = vmatprep.subr.bf16.mxu0 0
  %280 = vmatpush1.bf16.msra.mxu0 %v261
  %281 = vmatprep.subr.bf16.mxu0 0
  %282 = vmatpush1.bf16.msra.mxu0 %v262
  %283 = vmatprep.subr.bf16.mxu0 0
  %284 = vmatpush1.bf16.msra.mxu0 %v263
  %285 = vmatprep.subr.bf16.mxu0 0
  %286 = vmatpush1.bf16.msra.mxu0 %v264
  %287 = vmatprep.subr.bf16.mxu0 0
  %288 = vmatpush1.bf16.msra.mxu0 %v265
  %289 = vmatprep.subr.bf16.mxu0 0
  %290 = vmatpush1.bf16.msra.mxu0 %v266
  %291 = vmatprep.subr.bf16.mxu0 0
  %292 = vmatpush1.bf16.msra.mxu0 0
  %293 = vmatprep.subr.bf16.mxu0 0
  %294 = vmatpush1.bf16.msra.mxu0 0
  %295 = vmatprep.subr.bf16.mxu0 0
  %296 = vmatpush1.bf16.msra.mxu0 0
  %297 = vmatprep.subr.bf16.mxu0 0
  %298 = vmatpush1.bf16.msra.mxu0 0
  %299 = vmatprep.subr.bf16.mxu0 0
  %300 = vmatpush1.bf16.msra.mxu0 0
  %301 = vmatprep.subr.bf16.mxu0 0
  %302 = vmatpush1.bf16.msra.mxu0 0
  %303 = vmatprep.subr.bf16.mxu0 0
  %304 = vmatpush1.bf16.msra.mxu0 0
  %305 = vmatprep.subr.bf16.mxu0 0
  %306 = vmatpush1.bf16.msra.mxu0 0
  %307 = vmatprep.mubr.bf16.mxu0 0
  %308 = vmatmul.mubr.bf16.gmra.mrb[0].mxu0 %v202
  %v309 = vpop.f32.mrb[0].mxu0
  %v310 = vadd.f32 %v225, %v309
  %v311 = vpop.f32.mrb[0].mxu0
  %v312 = vpop.f32.mrb[0].mxu0
  %v313 = vadd.f32 %v225, %v312
  %v314 = vpop.f32.mrb[0].mxu0
  %315 = vmatprep.mubr.bf16.mxu0 0
  %316 = vmatmul.mubr.bf16.gmra.mrb[0].mxu0 %v203
  %v317 = vpop.f32.mrb[0].mxu0
  %v318 = vadd.f32 %v225, %v317
  %v319 = vpop.f32.mrb[0].mxu0
  %v320 = vpop.f32.mrb[0].mxu0
  %v321 = vadd.f32 %v225, %v320
  %v322 = vpop.f32.mrb[0].mxu0
  %323 = vdwg.mxu0
  %vm324 = vcmp.gt.f32.partialorder %v40, 0.0
  %vm325 = vcmp.gt.f32.partialorder %v41, 0.0
  %vm326 = vcmp.gt.f32.partialorder %v42, 0.0
  %vm327 = vcmp.gt.f32.partialorder %v43, 0.0
  %v328 = vld [vmem:[%s6] sm:$0x1]
  %v329 = vsel %vm324, 1, 0
  %v330 = vsel %vm325, 1, 0
  %v331 = vsel %vm326, 1, 0
  %v332 = vsel %vm327, 1, 0
  %333 = vset.pattern.permute.xlu0 0
  %334 = vperm.xlu0 %333, %v329
  %v335 = vpop.permute.xlu0 %334
  %336 = vset.pattern.permute.xlu0 0
  %337 = vperm.xlu0 %336, %v330
  %v338 = vpop.permute.xlu0 %337
  %339 = vset.pattern.permute.xlu0 0
  %340 = vperm.xlu0 %339, %v331
  %v341 = vpop.permute.xlu0 %340
  %342 = vset.pattern.permute.xlu0 0
  %343 = vperm.xlu0 %342, %v332
  %v344 = vpop.permute.xlu0 %343
  %vm345 = vcmp.eq.s32.totalorder %v335, 1
  %vm346 = vcmp.eq.s32.totalorder %v338, 1
  %vm347 = vcmp.eq.s32.totalorder %v341, 1
  %vm348 = vcmp.eq.s32.totalorder %v344, 1
  %v350 = vlaneseq
  %v351 = vshrl.u32 %v350, 7
  %v352 = vsub.s32 0, %v351
  %v353 = vrot.slane %v328, %v352
  %v355 = vsel %vm345, %v353, %v310
  %v356 = vsel %vm346, %v353, %v313
  %v357 = vsel %vm347, %v353, %v318
  %v358 = vsel %vm348, %v353, %v321
  %v359 = vpack.c.bf16 %v356, %v355
  %v360 = vpack.c.bf16 %v358, %v357
  %v363 = vunpack.c.l.b16 %v359
  %v364 = vunpack.c.h.b16 %v359
  %v365 = vunpack.c.l.b16 %v360
  %v366 = vunpack.c.h.b16 %v360
  %v367 = vpack.c.b16 %v363, %v363
  %v368 = vpack.c.b16 %v364, %v364
  %v369 = vpack.c.b16 %v365, %v365
  %v370 = vpack.c.b16 %v366, %v366
  %375 = vst [vmem:[%s9] sm:$0xf] %v367
  %376 = vst [vmem:[%s9 + $0x4] sm:$0xf] %v368
  %377 = vst [vmem:[%s9 + $0x8] sm:$0xf] %v369
  %378 = vst [vmem:[%s9 + $0xc] sm:$0xf] %v370
  %v379 = vpack.c.bf16 %v313, %v310
  %v380 = vpack.c.bf16 %v321, %v318
  %v383 = vunpack.c.l.b16 %v379
  %v384 = vunpack.c.h.b16 %v379
  %v385 = vunpack.c.l.b16 %v380
  %v386 = vunpack.c.h.b16 %v380
  %v387 = vpack.c.b16 %v383, %v383
  %v388 = vpack.c.b16 %v384, %v384
  %v389 = vpack.c.b16 %v385, %v385
  %v390 = vpack.c.b16 %v386, %v386
  %395 = vst [vmem:[%s10] sm:$0xf] %v387
  %396 = vst [vmem:[%s10 + $0x4] sm:$0xf] %v388
  %397 = vst [vmem:[%s10 + $0x8] sm:$0xf] %v389
  %398 = vst [vmem:[%s10 + $0xc] sm:$0xf] %v390
  %v399 = vld [vmem:[%s7] sm:$0xf]
  %v400 = vld [vmem:[%s7 + $0x4] sm:$0xf]
  %v401 = vld [vmem:[%s7 + $0x8] sm:$0xf]
  %v402 = vld [vmem:[%s7 + $0xc] sm:$0xf]
  %v403 = vld [vmem:[%s7 + $0x10] sm:$0xf]
  %v404 = vld [vmem:[%s7 + $0x14] sm:$0xf]
  %v405 = vld [vmem:[%s7 + $0x18] sm:$0xf]
  %v406 = vld [vmem:[%s7 + $0x1c] sm:$0xf]
  %v407 = vld [vmem:[%s7 + $0x20] sm:$0xf]
  %v408 = vld [vmem:[%s7 + $0x24] sm:$0xf]
  %v409 = vld [vmem:[%s7 + $0x28] sm:$0xf]
  %v410 = vld [vmem:[%s7 + $0x2c] sm:$0xf]
  %v411 = vld [vmem:[%s7 + $0x30] sm:$0xf]
  %v412 = vld [vmem:[%s7 + $0x34] sm:$0xf]
  %v413 = vld [vmem:[%s7 + $0x38] sm:$0xf]
  %v414 = vld [vmem:[%s7 + $0x3c] sm:$0xf]
  %v415 = vld [vmem:[%s8] sm:$0x1]
  %v417 = vlaneseq
  %v418 = vshrl.u32 %v417, 7
  %v419 = vsub.s32 0, %v418
  %v420 = vrot.slane %v415, %v419
  %v438 = vunpack.c.l.b16 %v399
  %v439 = vunpack.c.l.b16 %v400
  %v440 = vunpack.c.l.b16 %v401
  %v441 = vunpack.c.l.b16 %v402
  %v442 = vunpack.c.l.b16 %v403
  %v443 = vunpack.c.l.b16 %v404
  %v444 = vunpack.c.l.b16 %v405
  %v445 = vunpack.c.l.b16 %v406
  %v446 = vunpack.c.l.b16 %v407
  %v447 = vunpack.c.l.b16 %v408
  %v448 = vunpack.c.l.b16 %v409
  %v449 = vunpack.c.l.b16 %v410
  %v450 = vunpack.c.l.b16 %v411
  %v451 = vunpack.c.l.b16 %v412
  %v452 = vunpack.c.l.b16 %v413
  %v453 = vunpack.c.l.b16 %v414
  %v454 = vpack.c.b16 %v439, %v438
  %v455 = vpack.c.b16 %v441, %v440
  %v456 = vpack.c.b16 %v443, %v442
  %v457 = vpack.c.b16 %v445, %v444
  %v458 = vpack.c.b16 %v447, %v446
  %v459 = vpack.c.b16 %v449, %v448
  %v460 = vpack.c.b16 %v451, %v450
  %v461 = vpack.c.b16 %v453, %v452
  %470 = vmatprep.subr.bf16.mxu0 0
  %471 = vmatpush1.bf16.msra.mxu0 %v454
  %472 = vmatprep.subr.bf16.mxu0 0
  %473 = vmatpush1.bf16.msra.mxu0 %v455
  %474 = vmatprep.subr.bf16.mxu0 0
  %475 = vmatpush1.bf16.msra.mxu0 %v456
  %476 = vmatprep.subr.bf16.mxu0 0
  %477 = vmatpush1.bf16.msra.mxu0 %v457
  %478 = vmatprep.subr.bf16.mxu0 0
  %479 = vmatpush1.bf16.msra.mxu0 %v458
  %480 = vmatprep.subr.bf16.mxu0 0
  %481 = vmatpush1.bf16.msra.mxu0 %v459
  %482 = vmatprep.subr.bf16.mxu0 0
  %483 = vmatpush1.bf16.msra.mxu0 %v460
  %484 = vmatprep.subr.bf16.mxu0 0
  %485 = vmatpush1.bf16.msra.mxu0 %v461
  %486 = vmatprep.subr.bf16.mxu0 0
  %487 = vmatpush1.bf16.msra.mxu0 0
  %488 = vmatprep.subr.bf16.mxu0 0
  %489 = vmatpush1.bf16.msra.mxu0 0
  %490 = vmatprep.subr.bf16.mxu0 0
  %491 = vmatpush1.bf16.msra.mxu0 0
  %492 = vmatprep.subr.bf16.mxu0 0
  %493 = vmatpush1.bf16.msra.mxu0 0
  %494 = vmatprep.subr.bf16.mxu0 0
  %495 = vmatpush1.bf16.msra.mxu0 0
  %496 = vmatprep.subr.bf16.mxu0 0
  %497 = vmatpush1.bf16.msra.mxu0 0
  %498 = vmatprep.subr.bf16.mxu0 0
  %499 = vmatpush1.bf16.msra.mxu0 0
  %500 = vmatprep.subr.bf16.mxu0 0
  %501 = vmatpush1.bf16.msra.mxu0 0
  %502 = vmatprep.mubr.bf16.mxu0 0
  %503 = vmatmul.mubr.bf16.gmra.mrb[0].mxu0 %v359
  %v504 = vpop.f32.mrb[0].mxu0
  %v505 = vadd.f32 %v420, %v504
  %v506 = vpop.f32.mrb[0].mxu0
  %v507 = vpop.f32.mrb[0].mxu0
  %v508 = vadd.f32 %v420, %v507
  %v509 = vpop.f32.mrb[0].mxu0
  %510 = vmatprep.mubr.bf16.mxu0 0
  %511 = vmatmul.mubr.bf16.gmra.mrb[0].mxu0 %v360
  %v512 = vpop.f32.mrb[0].mxu0
  %v513 = vadd.f32 %v420, %v512
  %v514 = vpop.f32.mrb[0].mxu0
  %v515 = vpop.f32.mrb[0].mxu0
  %v516 = vadd.f32 %v420, %v515
  %v517 = vpop.f32.mrb[0].mxu0
  %518 = vdwg.mxu0
  %v519 = vsub.f32 %v36, %v505
  %v520 = vsub.f32 %v37, %v508
  %v521 = vsub.f32 %v38, %v513
  %v522 = vsub.f32 %v39, %v516
  %v523 = vand.u32 2147483647, %v519
  %v524 = vand.u32 2147483647, %v520
  %v525 = vand.u32 2147483647, %v521
  %v526 = vand.u32 2147483647, %v522
  %527 = vadd.xlane.f32.xlu0 %v523
  %v528 = vpop.xlane.xlu0 %527
  %529 = vadd.xlane.f32.xlu0 %v524
  %v530 = vpop.xlane.xlu0 %529
  %531 = vadd.xlane.f32.xlu0 %v525
  %v532 = vpop.xlane.xlu0 %531
  %533 = vadd.xlane.f32.xlu0 %v526
  %v534 = vpop.xlane.xlu0 %533
  %v535 = vmul.f32 %v528, %v40
  %v536 = vmul.f32 %v530, %v41
  %v537 = vmul.f32 %v532, %v42
  %v538 = vmul.f32 %v534, %v43
  %vm539 = vcmask 7168
  %v540 = vsel %vm539, %v535, 0.0
  %v541 = vsel %vm539, %v536, 0.0
  %v542 = vadd.f32 %v540, %v541
  %v543 = vsel %vm539, %v537, 0.0
  %v544 = vadd.f32 %v542, %v543
  %v545 = vsel %vm539, %v538, 0.0
  %v546 = vadd.f32 %v544, %v545
  %547 = vadd.xlane.f32.xlu0 %v546
  %v548 = vpop.xlane.xlu0 %547
  %v549 = vrot.slane %v548, 4
  %v550 = vadd.f32 %v548, %v549
  %v551 = vrot.slane %v550, 2
  %v552 = vadd.f32 %v550, %v551
  %v553 = vrot.slane %v552, 1
  %v554 = vadd.f32 %v552, %v553
  %s555 = vtos %v554
  %v556 = vstv %s555
  %557 = vst [vmem:[%s11] sm:$0x1] %v556
  // Predicated region
  $region38: #{_lambda_.2} parent=0 // pred_check
    _
  $region39: #{_lambda_.2} parent=0 // pred_check_branch
    %559 = sbr.rel (0) target = $region41
  $region40: #{_lambda_.2} parent=0 // pred_region
    _
  $region41: #{_lambda_.2} parent=0 // pred_fallthru
    _
  // Predicated region
  $region42: #{_lambda_.2} parent=0 // pred_check
    _
  $region43: #{_lambda_.2} parent=0 // pred_check_branch
    %561 = sbr.rel (0) target = $region45
  $region44: #{_lambda_.2} parent=0 // pred_region
    _
  $region45: #{_lambda_.2} parent=0 // pred_fallthru
    _
  // Predicated region
  $region46: #{_lambda_.2} parent=0 // pred_check
    _
  $region47: #{_lambda_.2} parent=0 // pred_check_branch
    %563 = sbr.rel (0) target = $region49
  $region48: #{_lambda_.2} parent=0 // pred_region
    _
  $region49: #{_lambda_.2} parent=0 // pred_fallthru
    _
  // Predicated region
  $region50: #{_lambda_.2} parent=0 // pred_check
    _
  $region51: #{_lambda_.2} parent=0 // pred_check_branch
    %565 = sbr.rel (0) target = $region53
  $region52: #{_lambda_.2} parent=0 // pred_region
    _
  $region53: #{_lambda_.2} parent=0 // pred_fallthru
    _
  // Predicated region
  $region54: #{_lambda_.2} parent=0 // pred_check
    _
  $region55: #{_lambda_.2} parent=0 // pred_check_branch
    %567 = sbr.rel (0) target = $region57
  $region56: #{_lambda_.2} parent=0 // pred_region
    _
  $region57: #{_lambda_.2} parent=0 // pred_fallthru
    _
  // Predicated region
  $region58: #{_lambda_.2} parent=0 // pred_check
    _
  $region59: #{_lambda_.2} parent=0 // pred_check_branch
    %569 = sbr.rel (0) target = $region61
  $region60: #{_lambda_.2} parent=0 // pred_region
    _
  $region61: #{_lambda_.2} parent=0 // pred_fallthru
    _

</llo_original>
